<compile_context>
chip_gen: v7x
topology: tpu7x:2x2x1
jax: 0.10.0
libtpu: 0.0.40
codegen_flags: <defaults>
</compile_context>

<pallas_src>
import functools

import jax
import jax.numpy as jnp
from jax.experimental import pallas as pl
from jax.experimental.pallas import tpu as pltpu


def _round_up(n, m):
    return (n + m - 1) // m * m


def _vmem_capacity_bytes():
    """Physical per-TensorCore VMEM; conservative (v7x) fallback."""
    try:
        info = pltpu.get_tpu_info()
        cap = getattr(info, "vmem_capacity_bytes", None)
        if cap:
            return int(cap)
    except Exception:
        pass
    return 64 << 20


def _choose_tv(V, cap=2048):
    """Largest vocab-chunk width that divides V, is a multiple of 128 and
    is <= cap.  If V is not lane-aligned, the whole vocab is one chunk."""
    if V <= cap or (V % 128) != 0:
        return V
    best = 128
    d = 128
    while d <= cap:
        if V % d == 0:
            best = d
        d += 128
    return best


def _label_smoothing_kernel(x_ref, t_ref, out_ref, m_sc, se_sc, xw_sc, *,
                            n_rows, tn, tv, vocab,
                            padding_idx, confidence, smoothing):
    i = pl.program_id(0)          # row-tile index   ("parallel")
    j = pl.program_id(1)          # vocab-tile index ("arbitrary" / reduction)
    n_v = pl.num_programs(1)

    @pl.when(j == 0)
    def _():
        m_sc[...] = jnp.full(m_sc.shape, -jnp.inf, dtype=m_sc.dtype)
        se_sc[...] = jnp.zeros(se_sc.shape, dtype=se_sc.dtype)
        xw_sc[...] = jnp.zeros(xw_sc.shape, dtype=xw_sc.dtype)

    x = x_ref[...].astype(jnp.float32)            # (tn, tv) in-register upcast
    t = t_ref[...]                                # (tn, 1)  int32

    # Pass 1 over the chunk: row max, row sum, and gathered x[target].
    chunk_max = jnp.max(x, axis=-1, keepdims=True)                    # (tn, 1)
    sum_x = jnp.sum(x, axis=-1, keepdims=True)                        # (tn, 1)
    vocab_iota = j * tv + jax.lax.broadcasted_iota(jnp.int32, x.shape, 1)
    x_at_t = jnp.sum(jnp.where(vocab_iota == t, x, 0.0),
                     axis=-1, keepdims=True)                          # (tn, 1)

    # Online log-sum-exp update (pass 2: single exp over the chunk).
    m_old = m_sc[...]
    m_new = jnp.maximum(m_old, chunk_max)
    se_sc[...] = (se_sc[...] * jnp.exp(m_old - m_new)
                  + jnp.sum(jnp.exp(x - m_new), axis=-1, keepdims=True))
    m_sc[...] = m_new

    # Fused label-smoothing weighted sum (no (tn, tv) weight tensor):
    #   loss_row = lse - [conf * x[t] + (smooth / V) * sum(x)]
    xw_sc[...] += confidence * x_at_t + (smoothing / vocab) * sum_x

    @pl.when(j == n_v - 1)
    def _():
        lse = jnp.log(se_sc[...]) + m_sc[...]                         # (tn, 1)
        valid = t != padding_idx                                      # (tn, 1)
        if (n_rows % tn) != 0:
            # Last row tile is ragged: stale/padded rows produce garbage LSE,
            # but every reduction above is strictly per-row, so masking here
            # is sufficient (no extra full-tile select on x).
            row_ids = i * tn + jax.lax.broadcasted_iota(jnp.int32, (tn, 1), 0)
            valid = jnp.logical_and(valid, row_ids < n_rows)
        loss = jnp.where(valid, lse - xw_sc[...], 0.0)
        partial = jnp.sum(loss)

        # Lane-dense (8, 128) output tile: partial in [0, 0], zeros elsewhere
        # (one unmasked full-tile store).
        r = jax.lax.broadcasted_iota(jnp.int32, (8, 128), 0)
        c = jax.lax.broadcasted_iota(jnp.int32, (8, 128), 1)
        out_ref[...] = jnp.where((r == 0) & (c == 0), partial, 0.0)[None]


def label_smoothing_loss(x, target, *, padding_idx, smoothing=0.0,
                         tn=None, tv=None,
                         vmem_input_budget_bytes=24 << 20):
    """Pallas TPU implementation of GNMT LabelSmoothing.forward (sum loss).

    x:      (N, V) logits (f32 or bf16 — bf16 halves HBM traffic)
    target: (N,)   int token ids
    """
    N, V = x.shape
    confidence = 1.0 - smoothing
    itemsize = jnp.dtype(x.dtype).itemsize

    # ---- vocab (lane) chunk size -------------------------------------------
    if tv is None:
        tv = _choose_tv(V)
    tv = int(tv)
    assert tv == V or (V % tv == 0 and tv % 128 == 0), (
        "tv must divide V and be lane-aligned (or equal V)")
    grid_v = V // tv

    # ---- row tile: budget includes input double-buffer AND the ~4 f32
    #      per-element intermediates the compiler materializes --------------
    bytes_per_row = tv * (2 * itemsize + 4 * 4)
    max_tn = max(16, (vmem_input_budget_bytes // bytes_per_row) // 16 * 16)
    if tn is None:
        tn = max_tn
    # Keep >= 2 row tiles when N allows (megacore sharding on v7x), never
    # bigger than the padded row count, multiple of 16 (bf16 sublane packing).
    tn = int(max(16, min(_round_up(tn, 16), max_tn,
                         _round_up(pl.cdiv(N, 2), 16),
                         _round_up(N, 16))))
    grid_rows = pl.cdiv(N, tn)

    # ---- VMEM limit: working set + headroom, capped under physical VMEM ----
    x_block_bytes = tn * tv * itemsize
    working_set = 2 * x_block_bytes + 4 * tn * tv * 4 + (1 << 20)
    vmem_cap = _vmem_capacity_bytes()
    vmem_limit = int(min(vmem_cap - (8 << 20),
                         max(32 << 20, working_set + (8 << 20))))

    t2d = target.reshape(N, 1).astype(jnp.int32)

    kernel = functools.partial(
        _label_smoothing_kernel,
        n_rows=int(N), tn=int(tn), tv=int(tv), vocab=float(V),
        padding_idx=int(padding_idx),
        confidence=float(confidence), smoothing=float(smoothing),
    )

    partials = pl.pallas_call(
        kernel,
        out_shape=jax.ShapeDtypeStruct((grid_rows, 8, 128), jnp.float32),
        grid_spec=pltpu.PrefetchScalarGridSpec(
            num_scalar_prefetch=0,
            grid=(grid_rows, grid_v),
            in_specs=[
                pl.BlockSpec((tn, tv), lambda i, j: (i, j)),
                pl.BlockSpec((tn, 1), lambda i, j: (i, 0)),
            ],
            out_specs=pl.BlockSpec((1, 8, 128), lambda i, j: (i, 0, 0)),
            scratch_shapes=[
                pltpu.VMEM((tn, 1), jnp.float32),   # running max
                pltpu.VMEM((tn, 1), jnp.float32),   # running sum-exp
                pltpu.VMEM((tn, 1), jnp.float32),   # running weighted sum
            ],
        ),
        compiler_params=pltpu.CompilerParams(
            dimension_semantics=("parallel", "arbitrary"),
            vmem_limit_bytes=vmem_limit,
        ),
    )(x, t2d)

    return jnp.sum(partials)


def _reference(x, target, padding_idx, smoothing):
    logprobs = jax.nn.log_softmax(x.astype(jnp.float32), axis=-1)
    non_pad = target != padding_idx
    nll = -jnp.take_along_axis(logprobs, target[:, None], axis=-1)[:, 0]
    smooth = -jnp.mean(logprobs, axis=-1)
    loss = (1.0 - smoothing) * nll + smoothing * smooth
    return jnp.sum(jnp.where(non_pad, loss, 0.0))


if __name__ == "__main__":
    key = jax.random.PRNGKey(0)
    kx, kt, kx2, kt2, kx3, kt3 = jax.random.split(key, 6)

    padding_idx = 0
    smoothing = 0.1

    # Case 1: small GNMT-like shape, f32 logits, single tile.
    N, V = 16, 128
    x = jax.random.normal(kx, (N, V), dtype=jnp.float32)
    target = jax.random.randint(kt, (N,), 0, V, dtype=jnp.int32)
    target = target.at[3].set(padding_idx).at[7].set(padding_idx)

    loss = jax.block_until_ready(
        label_smoothing_loss(x, target, padding_idx=padding_idx,
                             smoothing=smoothing))
    ref = _reference(x, target, padding_idx, smoothing)
    assert jnp.allclose(loss, ref, rtol=1e-5, atol=1e-5), (loss, ref)

    # Case 2: ragged N (not a multiple of the row tile) + bf16 logits.
    N2, V2 = 20, 256
    x2 = jax.random.normal(kx2, (N2, V2), dtype=jnp.float32).astype(jnp.bfloat16)
    target2 = jax.random.randint(kt2, (N2,), 0, V2, dtype=jnp.int32)
    target2 = target2.at[0].set(padding_idx).at[11].set(padding_idx)

    loss2 = jax.block_until_ready(
        label_smoothing_loss(x2, target2, padding_idx=padding_idx,
                             smoothing=smoothing))
    ref2 = _reference(x2, target2, padding_idx, smoothing)
    assert jnp.allclose(loss2, ref2, rtol=1e-4, atol=1e-4), (loss2, ref2)

    # Case 3: exercise the streamed-vocab path (grid over vocab chunks with
    # online LSE) + ragged rows + multiple row tiles.
    N3, V3 = 24, 512
    x3 = jax.random.normal(kx3, (N3, V3), dtype=jnp.float32)
    target3 = jax.random.randint(kt3, (N3,), 0, V3, dtype=jnp.int32)
    target3 = target3.at[5].set(padding_idx).at[17].set(padding_idx)

    loss3 = jax.block_until_ready(
        label_smoothing_loss(x3, target3, padding_idx=padding_idx,
                             smoothing=smoothing, tn=16, tv=128))
    ref3 = _reference(x3, target3, padding_idx, smoothing)
    assert jnp.allclose(loss3, ref3, rtol=1e-5, atol=1e-5), (loss3, ref3)

    print("KERNEL_OK")
</pallas_src>

<mosaic_0001>
module attributes {stable_mosaic.version = 11 : i64} {
  func.func @_label_smoothing_kernel(%arg0: i32, %arg1: i32, %arg2: memref<16x128xf32, #tpu.memory_space<vmem>>, %arg3: memref<16x1xi32, #tpu.memory_space<vmem>>, %arg4: memref<1x8x128xf32, #tpu.memory_space<vmem>>, %arg5: memref<16x1xf32, #tpu.memory_space<vmem>>, %arg6: memref<16x1xf32, #tpu.memory_space<vmem>>, %arg7: memref<16x1xf32, #tpu.memory_space<vmem>>) attributes {dimension_semantics = [#tpu.dimension_semantics<parallel>, #tpu.dimension_semantics<arbitrary>], iteration_bounds = array<i64: 1, 1>, scalar_prefetch = 0 : i64, scratch_operands = 3 : i64, tpu.core_type = #tpu.core_type<tc>, window_params = [{transform_indices = @transform_0, window_bounds = array<i64: 16, 128>}, {transform_indices = @transform_1, window_bounds = array<i64: 16, 1>}, {transform_indices = @transform_2, window_bounds = array<i64: 1, 8, 128>}]} {
    %c0_i32 = arith.constant 0 : i32
    %0 = arith.cmpi eq, %arg1, %c0_i32 : i32
    %1 = arith.extui %0 : i1 to i32
    %c0_i32_0 = arith.constant 0 : i32
    %2 = arith.cmpi ne, %1, %c0_i32_0 : i32
    scf.if %2 {
      %cst_24 = arith.constant 0xFF800000 : f32
      %44 = vector.broadcast %cst_24 : f32 to vector<16x1xf32>
      %c0_25 = arith.constant 0 : index
      %c0_26 = arith.constant 0 : index
      %45 = vector.load %arg5[%c0_25, %c0_26] : memref<16x1xf32, #tpu.memory_space<vmem>>, vector<16x1xf32>
      tpu.vector_store %arg5[%c0_25, %c0_26], %44 {strides = array<i32>} : memref<16x1xf32, #tpu.memory_space<vmem>>, vector<16x1xf32>,
      %cst_27 = arith.constant 0.000000e+00 : f32
      %46 = vector.broadcast %cst_27 : f32 to vector<16x1xf32>
      %c0_28 = arith.constant 0 : index
      %c0_29 = arith.constant 0 : index
      %47 = vector.load %arg6[%c0_28, %c0_29] : memref<16x1xf32, #tpu.memory_space<vmem>>, vector<16x1xf32>
      tpu.vector_store %arg6[%c0_28, %c0_29], %46 {strides = array<i32>} : memref<16x1xf32, #tpu.memory_space<vmem>>, vector<16x1xf32>,
      %cst_30 = arith.constant 0.000000e+00 : f32
      %48 = vector.broadcast %cst_30 : f32 to vector<16x1xf32>
      %c0_31 = arith.constant 0 : index
      %c0_32 = arith.constant 0 : index
      %49 = vector.load %arg7[%c0_31, %c0_32] : memref<16x1xf32, #tpu.memory_space<vmem>>, vector<16x1xf32>
      tpu.vector_store %arg7[%c0_31, %c0_32], %48 {strides = array<i32>} : memref<16x1xf32, #tpu.memory_space<vmem>>, vector<16x1xf32>,
    } else {
    }
    %c0 = arith.constant 0 : index
    %c0_1 = arith.constant 0 : index
    %3 = vector.load %arg2[%c0, %c0_1] : memref<16x128xf32, #tpu.memory_space<vmem>>, vector<16x128xf32>
    %c0_2 = arith.constant 0 : index
    %c0_3 = arith.constant 0 : index
    %4 = vector.load %arg3[%c0_2, %c0_3] : memref<16x1xi32, #tpu.memory_space<vmem>>, vector<16x1xi32>
    %cst = arith.constant dense<0xFF800000> : vector<16xf32>
    %5 = vector.multi_reduction <maximumf>, %3, %cst [1] : vector<16x128xf32> to vector<16xf32>
    %6 = vector.shape_cast %5 : vector<16xf32> to vector<16x1xf32>
    %cst_4 = arith.constant dense<0.000000e+00> : vector<16xf32>
    %7 = vector.multi_reduction <add>, %3, %cst_4 [1] : vector<16x128xf32> to vector<16xf32>
    %8 = vector.shape_cast %7 : vector<16xf32> to vector<16x1xf32>
    %c128_i32 = arith.constant 128 : i32
    %9 = arith.muli %arg1, %c128_i32 : i32
    %10 = tpu.iota {dimensions = array<i32: 1>} : vector<16x128xi32>
    %11 = vector.broadcast %9 : i32 to vector<16x128xi32>
    %12 = arith.addi %11, %10 : vector<16x128xi32>
    %13 = vector.broadcast %4 : vector<16x1xi32> to vector<16x128xi32>
    %14 = arith.cmpi eq, %12, %13 : vector<16x128xi32>
    %cst_5 = arith.constant 0.000000e+00 : f32
    %15 = vector.broadcast %cst_5 : f32 to vector<16x128xf32>
    %16 = arith.select %14, %3, %15 : vector<16x128xi1>, vector<16x128xf32>
    %cst_6 = arith.constant dense<0.000000e+00> : vector<16xf32>
    %17 = vector.multi_reduction <add>, %16, %cst_6 [1] : vector<16x128xf32> to vector<16xf32>
    %18 = vector.shape_cast %17 : vector<16xf32> to vector<16x1xf32>
    %c0_7 = arith.constant 0 : index
    %c0_8 = arith.constant 0 : index
    %19 = vector.load %arg5[%c0_7, %c0_8] : memref<16x1xf32, #tpu.memory_space<vmem>>, vector<16x1xf32>
    %20 = arith.maximumf %19, %6 : vector<16x1xf32>
    %c0_9 = arith.constant 0 : index
    %c0_10 = arith.constant 0 : index
    %21 = vector.load %arg6[%c0_9, %c0_10] : memref<16x1xf32, #tpu.memory_space<vmem>>, vector<16x1xf32>
    %22 = arith.subf %19, %20 : vector<16x1xf32>
    %23 = math.exp %22 : vector<16x1xf32>
    %24 = arith.mulf %21, %23 : vector<16x1xf32>
    %25 = vector.broadcast %20 : vector<16x1xf32> to vector<16x128xf32>
    %26 = arith.subf %3, %25 : vector<16x128xf32>
    %27 = math.exp %26 : vector<16x128xf32>
    %cst_11 = arith.constant dense<0.000000e+00> : vector<16xf32>
    %28 = vector.multi_reduction <add>, %27, %cst_11 [1] : vector<16x128xf32> to vector<16xf32>
    %29 = vector.shape_cast %28 : vector<16xf32> to vector<16x1xf32>
    %30 = arith.addf %24, %29 : vector<16x1xf32>
    %c0_12 = arith.constant 0 : index
    %c0_13 = arith.constant 0 : index
    %31 = vector.load %arg6[%c0_12, %c0_13] : memref<16x1xf32, #tpu.memory_space<vmem>>, vector<16x1xf32>
    tpu.vector_store %arg6[%c0_12, %c0_13], %30 {strides = array<i32>} : memref<16x1xf32, #tpu.memory_space<vmem>>, vector<16x1xf32>,
    %c0_14 = arith.constant 0 : index
    %c0_15 = arith.constant 0 : index
    %32 = vector.load %arg5[%c0_14, %c0_15] : memref<16x1xf32, #tpu.memory_space<vmem>>, vector<16x1xf32>
    tpu.vector_store %arg5[%c0_14, %c0_15], %20 {strides = array<i32>} : memref<16x1xf32, #tpu.memory_space<vmem>>, vector<16x1xf32>,
    %c0_16 = arith.constant 0 : index
    %c0_17 = arith.constant 0 : index
    %33 = vector.load %arg7[%c0_16, %c0_17] : memref<16x1xf32, #tpu.memory_space<vmem>>, vector<16x1xf32>
    %cst_18 = arith.constant 0.899999976 : f32
    %34 = vector.broadcast %cst_18 : f32 to vector<16x1xf32>
    %35 = arith.mulf %34, %18 : vector<16x1xf32>
    %cst_19 = arith.constant 7.812500e-04 : f32
    %36 = vector.broadcast %cst_19 : f32 to vector<16x1xf32>
    %37 = arith.mulf %36, %8 : vector<16x1xf32>
    %38 = arith.addf %35, %37 : vector<16x1xf32>
    %39 = arith.addf %33, %38 : vector<16x1xf32>
    %c0_20 = arith.constant 0 : index
    %c0_21 = arith.constant 0 : index
    %40 = vector.load %arg7[%c0_20, %c0_21] : memref<16x1xf32, #tpu.memory_space<vmem>>, vector<16x1xf32>
    tpu.vector_store %arg7[%c0_20, %c0_21], %39 {strides = array<i32>} : memref<16x1xf32, #tpu.memory_space<vmem>>, vector<16x1xf32>,
    %c0_i32_22 = arith.constant 0 : i32
    %41 = arith.cmpi eq, %arg1, %c0_i32_22 : i32
    %42 = arith.extui %41 : i1 to i32
    %c0_i32_23 = arith.constant 0 : i32
    %43 = arith.cmpi ne, %42, %c0_i32_23 : i32
    scf.if %43 {
      %c0_24 = arith.constant 0 : index
      %c0_25 = arith.constant 0 : index
      %44 = vector.load %arg6[%c0_24, %c0_25] : memref<16x1xf32, #tpu.memory_space<vmem>>, vector<16x1xf32>
      %45 = math.log %44 : vector<16x1xf32>
      %c0_26 = arith.constant 0 : index
      %c0_27 = arith.constant 0 : index
      %46 = vector.load %arg5[%c0_26, %c0_27] : memref<16x1xf32, #tpu.memory_space<vmem>>, vector<16x1xf32>
      %47 = arith.addf %45, %46 : vector<16x1xf32>
      %c0_i32_28 = arith.constant 0 : i32
      %48 = vector.broadcast %c0_i32_28 : i32 to vector<16x1xi32>
      %49 = arith.cmpi ne, %4, %48 : vector<16x1xi32>
      %c0_29 = arith.constant 0 : index
      %c0_30 = arith.constant 0 : index
      %50 = vector.load %arg7[%c0_29, %c0_30] : memref<16x1xf32, #tpu.memory_space<vmem>>, vector<16x1xf32>
      %51 = arith.subf %47, %50 : vector<16x1xf32>
      %cst_31 = arith.constant 0.000000e+00 : f32
      %52 = vector.broadcast %cst_31 : f32 to vector<16x1xf32>
      %53 = arith.select %49, %51, %52 : vector<16x1xi1>, vector<16x1xf32>
      %54 = vector.shape_cast %53 : vector<16x1xf32> to vector<1x16x1xf32>
      %cst_32 = arith.constant dense<0.000000e+00> : vector<1xf32>
      %55 = vector.multi_reduction <add>, %54, %cst_32 [1, 2] : vector<1x16x1xf32> to vector<1xf32>
      %56 = vector.shape_cast %55 : vector<1xf32> to vector<1x1x1xf32>
      %57 = vector.extract %56[0, 0, 0] : f32 from vector<1x1x1xf32>
      %58 = tpu.iota {dimensions = array<i32: 0>} : vector<8x128xi32>
      %59 = tpu.iota {dimensions = array<i32: 1>} : vector<8x128xi32>
      %c0_i32_33 = arith.constant 0 : i32
      %60 = vector.broadcast %c0_i32_33 : i32 to vector<8x128xi32>
      %61 = arith.cmpi eq, %58, %60 : vector<8x128xi32>
      %c0_i32_34 = arith.constant 0 : i32
      %62 = vector.broadcast %c0_i32_34 : i32 to vector<8x128xi32>
      %63 = arith.cmpi eq, %59, %62 : vector<8x128xi32>
      %64 = arith.andi %61, %63 : vector<8x128xi1>
      %cst_35 = arith.constant 0.000000e+00 : f32
      %65 = vector.broadcast %57 : f32 to vector<8x128xf32>
      %66 = vector.broadcast %cst_35 : f32 to vector<8x128xf32>
      %67 = arith.select %64, %65, %66 : vector<8x128xi1>, vector<8x128xf32>
      %68 = vector.shape_cast %67 : vector<8x128xf32> to vector<1x8x128xf32>
      %c0_36 = arith.constant 0 : index
      %c0_37 = arith.constant 0 : index
      %c0_38 = arith.constant 0 : index
      %69 = vector.load %arg4[%c0_36, %c0_37, %c0_38] : memref<1x8x128xf32, #tpu.memory_space<vmem>>, vector<1x8x128xf32>
      tpu.vector_store %arg4[%c0_36, %c0_37, %c0_38], %68 {strides = array<i32>} : memref<1x8x128xf32, #tpu.memory_space<vmem>>, vector<1x8x128xf32>,
    } else {
    }
    return
  }
  func.func @transform_0(%arg0: i32, %arg1: i32) -> (i32, i32) {
    %c0_i32 = arith.constant 0 : i32
    return %arg0, %arg1 : i32, i32
  }
  func.func @transform_1(%arg0: i32, %arg1: i32) -> (i32, i32) {
    %c0_i32 = arith.constant 0 : i32
    %c0_i32_0 = arith.constant 0 : i32
    return %arg0, %c0_i32 : i32, i32
  }
  func.func @transform_2(%arg0: i32, %arg1: i32) -> (i32, i32, i32) {
    %c0_i32 = arith.constant 0 : i32
    %c0_i32_0 = arith.constant 0 : i32
    %c0_i32_1 = arith.constant 0 : i32
    return %arg0, %c0_i32, %c0_i32_0 : i32, i32, i32
  }
}

</mosaic_0001>

<llo_original>
// kernel: tpu_custom_call.1
$region0: #{tpu_custom_call.1}
  #allocation0 [shape = 'u32[]', space=smem, size = 0x4, offset = 0x4, fixed_abs, tag = 'smem constant byte address 0x4 - core index']
  #allocation1 [shape = 'u32[144,128]{1,0:T(1,128)}', space=vmem, size = 0x12000, scoped, tag = 'internal scratch']
  #allocation2 [shape = 'f32[16,1]{1,0:T(8,128)}', space=vmem, size = 0x2000, scoped, tag = 'scratch operand']
  #allocation3 [shape = 'f32[16,1]{1,0:T(8,128)}', space=vmem, size = 0x2000, scoped, tag = 'scratch operand']
  #allocation4 [shape = 'f32[16,1]{1,0:T(8,128)}', space=vmem, size = 0x2000, scoped, tag = 'scratch operand']
  %s0 = inlined_call_operand.vmem [shape: f32[16,128], index: 0, kind: input, shape index: {}]
  %s1 = inlined_call_operand.vmem [shape: s32[16,1], index: 1, kind: input, shape index: {}]
  %s2 = inlined_call_operand.hbm [shape: f32[1,8,128], index: 2, kind: output, shape index: {}]
  %s3 = sld [smem:[#allocation0]]
  $region26: #{tpu_custom_call.1} parent=0
    _
  %s5 = ssub.s32 1, %s3
  %s6 = scalar_select 0, %s5, %s3
  $region1: #{tpu_custom_call.1} parent=0
    #allocation5 [shape = 'u8[4096]{0}', space=vmem, size = 0x1000, scoped, tag = 'output window, operand 0, single buffered']
    #allocation6 [shape = 's32[1]{0}', space=sflag, size = 0x4, scoped, tag = 'scoped memory for tpu_custom_call.1']
    %7 = vsyncpa [#allocation6], 0
    // Predicated region
    $region2: #{tpu_custom_call.1} parent=1 // pred_check
      _
    $region3: #{tpu_custom_call.1} parent=1 // pred_check_branch
      %9 = sbr.rel (0) target = $region5
    $region4: #{tpu_custom_call.1} parent=1 // pred_region
      _
    $region5: #{tpu_custom_call.1} parent=1 // pred_fallthru
      _
    // Predicated region
    $region6: #{tpu_custom_call.1} parent=1 // pred_check
      _
    $region7: #{tpu_custom_call.1} parent=1 // pred_check_branch
      %11 = sbr.rel (0) target = $region9
    $region8: #{tpu_custom_call.1} parent=1 // pred_region
      _
    $region9: #{tpu_custom_call.1} parent=1 // pred_fallthru
      _
    %p12 = scmp.eq.s32.totalorder 0, 0
    // Predicated region
    $region10: #{tpu_custom_call.1} parent=1 // pred_check
      %p13 = pneg %p12
    $region11: #{tpu_custom_call.1} parent=1 // pred_check_branch
      %15 = sbr.rel (%p13) target = $region13
    $region12: #{tpu_custom_call.1} parent=1 // pred_region
      %vm16 = vcmask 7168
      %17 = vst.msk [vmem:[#allocation2] sm:$0xff] %vm16, -inf
      %18 = vst.msk [vmem:[#allocation2 + $0x8] sm:$0xff] %vm16, -inf
      %19 = vst.msk [vmem:[#allocation3] sm:$0xff] %vm16, 0.0
      %20 = vst.msk [vmem:[#allocation3 + $0x8] sm:$0xff] %vm16, 0.0
      %21 = vst.msk [vmem:[#allocation4] sm:$0xff] %vm16, 0.0
      %22 = vst.msk [vmem:[#allocation4 + $0x8] sm:$0xff] %vm16, 0.0
    $region13: #{tpu_custom_call.1} parent=1 // pred_fallthru
      _
    %v23 = vld [vmem:[%s0] sm:$0xff]
    %v24 = vld [vmem:[%s0 + $0x8] sm:$0xff]
    %v25 = vld [vmem:[%s1] sm:$0xff]
    %v26 = vld [vmem:[%s1 + $0x8] sm:$0xff]
    %27 = vmax.xlane.f32.xlu0 %v23
    %v28 = vpop.xlane.xlu0 %27
    %29 = vmax.xlane.f32.xlu0 %v24
    %v30 = vpop.xlane.xlu0 %29
    %31 = vadd.xlane.f32.xlu0 %v23
    %v32 = vpop.xlane.xlu0 %31
    %33 = vadd.xlane.f32.xlu0 %v24
    %v34 = vpop.xlane.xlu0 %33
    %s35 = smul.u32 0, 128
    %v36 = vlaneseq
    %v37 = vand.u32 %v36, 127
    %v38 = vstv %s35
    %v39 = vadd.s32 %v38, %v37
    %40 = vset.pattern.permute.xlu0 0
    %41 = vperm.xlu0 %40, %v25
    %v42 = vpop.permute.xlu0 %41
    %43 = vset.pattern.permute.xlu0 0
    %44 = vperm.xlu0 %43, %v26
    %v45 = vpop.permute.xlu0 %44
    %vm46 = vcmp.eq.s32.totalorder %v39, %v42
    %vm47 = vcmp.eq.s32.totalorder %v39, %v45
    %v48 = vsel %vm46, %v23, 0.0
    %v49 = vsel %vm47, %v24, 0.0
    %50 = vadd.xlane.f32.xlu0 %v48
    %v51 = vpop.xlane.xlu0 %50
    %52 = vadd.xlane.f32.xlu0 %v49
    %v53 = vpop.xlane.xlu0 %52
    %v54 = vld [vmem:[#allocation2] sm:$0xff]
    %v55 = vld [vmem:[#allocation2 + $0x8] sm:$0xff]
    %v56 = vmax.f32 %v54, %v28
    %v57 = vmax.f32 %v55, %v30
    %v58 = vld [vmem:[#allocation3] sm:$0xff]
    %v59 = vld [vmem:[#allocation3 + $0x8] sm:$0xff]
    %v60 = vsub.f32 %v54, %v56
    %v61 = vsub.f32 %v55, %v57
    %v62 = vmul.f32 %v60, 1.442695
    %v63 = vpow.pop %v62
    %v64 = vmul.f32 %v61, 1.442695
    %v65 = vpow.pop %v64
    %v66 = vmul.f32 %v58, %v63
    %v67 = vmul.f32 %v59, %v65
    %69 = vset.pattern.permute.xlu0 0
    %70 = vperm.xlu0 %69, %v56
    %v71 = vpop.permute.xlu0 %70
    %74 = vset.pattern.permute.xlu0 0
    %75 = vperm.xlu0 %74, %v57
    %v76 = vpop.permute.xlu0 %75
    %v78 = vsub.f32 %v23, %v71
    %v79 = vsub.f32 %v24, %v76
    %v80 = vmul.f32 %v78, 1.442695
    %v81 = vpow.pop %v80
    %v82 = vmul.f32 %v79, 1.442695
    %v83 = vpow.pop %v82
    %84 = vadd.xlane.f32.xlu0 %v81
    %v85 = vpop.xlane.xlu0 %84
    %86 = vadd.xlane.f32.xlu0 %v83
    %v87 = vpop.xlane.xlu0 %86
    %v88 = vadd.f32 %v66, %v85
    %v89 = vadd.f32 %v67, %v87
    %vm90 = vcmask 7168
    %91 = vst.msk [vmem:[#allocation3] sm:$0xff] %vm90, %v88
    %92 = vst.msk [vmem:[#allocation3 + $0x8] sm:$0xff] %vm90, %v89
    %93 = vst.msk [vmem:[#allocation2] sm:$0xff] %vm90, %v56
    %94 = vst.msk [vmem:[#allocation2 + $0x8] sm:$0xff] %vm90, %v57
    %v95 = vld [vmem:[#allocation4] sm:$0xff]
    %v96 = vld [vmem:[#allocation4 + $0x8] sm:$0xff]
    %v97 = vmul.f32 %v51, 0.9
    %v98 = vmul.f32 %v53, 0.9
    %v99 = vmul.f32 %v32, 0.00078125
    %v100 = vmul.f32 %v34, 0.00078125
    %v101 = vadd.f32 %v97, %v99
    %v102 = vadd.f32 %v98, %v100
    %v103 = vadd.f32 %v95, %v101
    %v104 = vadd.f32 %v96, %v102
    %105 = vst.msk [vmem:[#allocation4] sm:$0xff] %vm90, %v103
    %106 = vst.msk [vmem:[#allocation4 + $0x8] sm:$0xff] %vm90, %v104
    // Predicated region
    $region14: #{tpu_custom_call.1} parent=1 // pred_check
      %p107 = pneg %p12
    $region15: #{tpu_custom_call.1} parent=1 // pred_check_branch
      %109 = sbr.rel (%p107) target = $region17
    $region16: #{tpu_custom_call.1} parent=1 // pred_region
      %v110 = vld [vmem:[#allocation3] sm:$0xff]
      %v111 = vld [vmem:[#allocation3 + $0x8] sm:$0xff]
      %v112 = vlog2.pop %v110
      %v113 = vmul.f32 %v112, 0.6931472
      %v114 = vlog2.pop %v111
      %v115 = vmul.f32 %v114, 0.6931472
      %v116 = vld [vmem:[#allocation2] sm:$0xff]
      %v117 = vld [vmem:[#allocation2 + $0x8] sm:$0xff]
      %v118 = vadd.f32 %v113, %v116
      %v119 = vadd.f32 %v115, %v117
      %vm120 = vcmp.ne.s32.totalorder %v25, 0
      %vm121 = vcmp.ne.s32.totalorder %v26, 0
      %v122 = vld [vmem:[#allocation4] sm:$0xff]
      %v123 = vld [vmem:[#allocation4 + $0x8] sm:$0xff]
      %v124 = vsub.f32 %v118, %v122
      %v125 = vsub.f32 %v119, %v123
      %v126 = vsel %vm120, %v124, 0.0
      %v127 = vsel %vm121, %v125, 0.0
      %v128 = vsel %vm90, %v126, 0.0
      %v129 = vsel %vm90, %v127, 0.0
      %v130 = vadd.f32 %v128, %v129
      %131 = vadd.xlane.f32.xlu0 %v130
      %v132 = vpop.xlane.xlu0 %131
      %v133 = vrot.slane %v132, 4
      %v134 = vadd.f32 %v132, %v133
      %v135 = vrot.slane %v134, 2
      %v136 = vadd.f32 %v134, %v135
      %v137 = vrot.slane %v136, 1
      %v138 = vadd.f32 %v136, %v137
      %s139 = vtos %v138
      %v140 = vlaneseq
      %v141 = vshrl.u32 %v140, 7
      %vm142 = vcmp.eq.s32.totalorder %v141, 0
      %vm143 = vcmp.eq.s32.totalorder %v37, 0
      %vm144 = vmand %vm142, %vm143
      %v145 = vstv %s139
      %v146 = vsel %vm144, %v145, 0.0
      %147 = vst [vmem:[#allocation5] sm:$0xff] %v146
    $region17: #{tpu_custom_call.1} parent=1 // pred_fallthru
      _
    // Predicated region
    $region18: #{tpu_custom_call.1} parent=1 // pred_check
      _
    $region19: #{tpu_custom_call.1} parent=1 // pred_check_branch
      %149 = sbr.rel (0) target = $region21
    $region20: #{tpu_custom_call.1} parent=1 // pred_region
      %s151 = ssub.s32 128, 128
      %152 = vsyncadd [#allocation6], %s151
      %s154 = sshll.u32 [#allocation5], 4
      %s155 = int_to_ptr.vmem [resolvable:$true] %s154
      %157 = dma.vmem_to_hbm [thread:$0]  %s155, 128, %s2, [#allocation6]
    $region21: #{tpu_custom_call.1} parent=1 // pred_fallthru
      _
    // Predicated region
    $region22: #{tpu_custom_call.1} parent=1 // pred_check
      _
    $region23: #{tpu_custom_call.1} parent=1 // pred_check_branch
      %159 = sbr.rel (0) target = $region25
    $region24: #{tpu_custom_call.1} parent=1 // pred_region
      %160 = dma.done [#allocation6], 128
    $region25: #{tpu_custom_call.1} parent=1 // pred_fallthru
      _
    %161 = vsyncpa [#allocation6], 1

</llo_original>
